<compile_context>
chip_gen: v7x
topology: tpu7x:2x2x1
jax: 0.10.0
libtpu: 0.0.40
codegen_flags: <defaults>
</compile_context>

<pallas_src>
import jax
import jax.numpy as jnp
from jax.experimental import pallas as pl
from jax.experimental.pallas import tpu as pltpu

HP = dict(
    vqemb_size=32,      # C (mel / VQ latent channels)
    hidden_size=32,     # H
    num_spk=1,
    beta_min=0.05,
    beta_max=20.0,
    pe_scale=1000,
)

C = HP['vqemb_size']
H = HP['hidden_size']

# packed-input column slots (each slot is C lanes wide; total width 5*C = 160 lanes)
# NOTE: x0 slot doubles as spk_embed (ref_enc-is-None branch => spk_embed == ref_mels);
# a future ref_enc path must add its own slot instead of reusing _IN_X0.
_IN_H, _IN_X0, _IN_Z, _IN_ZP, _IN_MISC = range(5)
IN_W = 5 * C                       # 160 lanes
# packed-output column slots (6*C = 192 lanes); diff_prompt_noise_gt (== zp) and
# diff_prompt_gt (== spk_embed) are returned straight from the wrapper, not stored.
_OUT_MEL, _OUT_X0P, _OUT_NP, _OUT_NGT, _OUT_PP, _OUT_PNP = range(6)
OUT_W = 6 * C                      # 192 lanes

# Row-tile cap: 2048 rows -> ~1.3 MiB in + ~1.6 MiB out per buffer, ~5.8 MiB
# double-buffered, well inside the explicit 32 MiB vmem limit on every generation.
ROW_TILE_MAX = 2048
# Always leave >= 4 grid steps so v7x's two TensorCores each get >= 2 "parallel" tiles.
MIN_GRID_TILES = 4


# ------------------------------------------------------------------ kernel ----
def _diffusion_tts_kernel(xin_ref, wp_ref, bias_ref, w1_ref, w2_ref, out_ref):
  f32 = jnp.float32
  bf16 = jnp.bfloat16
  xin = xin_ref[...]                                 # (R, 5*C) f32, one lane-dense load

  h = xin[:, 0 * C:1 * C]
  x0 = xin[:, 1 * C:2 * C]                           # also spk / prompt in this branch
  z = xin[:, 2 * C:3 * C]
  zzp = xin[:, 2 * C:4 * C]                          # [z | zp] contiguous (R, 2C)
  misc = xin[:, 4 * C:5 * C]
  keep = misc[:, 0:1]                                # 1.0 where mel2ph != 0 (== ~x_mask)
  t = misc[:, 1:2]

  biases = bias_ref[...]                             # (8, 2H) f32
  bp = biases[0:1, 0:C]
  b1 = biases[1:2, :]
  wt = biases[2:3, :]
  b2 = biases[3:4, :]

  # ---- Grad-TTS forward-SDE coefficients from t (EUP transcendentals, ~free) ----
  bmin, bmax = HP['beta_min'], HP['beta_max']
  cum = t * bmin + (0.5 * (bmax - bmin)) * (t * t)   # int_0^t beta(s) ds
  a = jnp.exp(-0.5 * cum)
  inv_a = jnp.exp(0.5 * cum)                         # exact 1/a (no approx reciprocal)
  sv = jnp.sqrt(1.0 - jnp.exp(-cum))                 # sqrt(variance)

  # ---- stub prior decoder output projection: mu = h @ Wp + bp  (mel_out) ----
  mu = jnp.dot(h.astype(bf16), wp_ref[...], preferred_element_type=f32) + bp

  # ---- closed-form forward SDE at time t (widened (R,64) elementwise ops) ----
  x0a = x0 * a
  zzpsv = zzp * sv                                   # (R, 2C): [z*sv | zp*sv]
  xt = (x0a + mu * (1.0 - a) + zzpsv[:, 0:C]) * keep # noised target latent
  pt = x0a + zzpsv[:, C:2 * C]                       # noised prompt latent (use_spk_prompt)

  # ---- fused noise estimator: one 128-deep MXU contraction -> [hid_main|hid_prompt] ----
  op = jnp.concatenate([xt, mu, x0, pt], axis=-1).astype(bf16)               # (R, 4C=128)
  hid = jnp.dot(op, w1_ref[...], preferred_element_type=f32) + b1 + wt * t   # (R, 2H)
  hid = jnp.maximum(hid, 0.0).astype(bf16)
  out2 = jnp.dot(hid, w2_ref[...], preferred_element_type=f32) + b2          # (R, 2C)
  noise_pred = out2[:, 0:C]
  pnoise = out2[:, C:2 * C]

  # ---- reconstructions (f32); keep applied once to the (R, 3C) masked slab ----
  # x0_pred = (xt - mu*(1-a) - sv*eps)/a * keep  ==  (x0 + sv/a*(z - eps)) * keep
  svia = sv * inv_a
  masked = jnp.concatenate(
      [x0 + svia * (z - noise_pred), noise_pred, z], axis=-1) * keep          # (R, 3C)
  ppred = (pt - sv * pnoise) * inv_a                 # prompt path: no x_mask masking

  # ---- one lane-dense (R, 6*C) store: [mu | x0_pred | noise_pred | noise_gt | pp | pnp]
  out_ref[...] = jnp.concatenate([mu, masked, ppred, pnoise], axis=-1)


def _round_up(x, m):
  return ((x + m - 1) // m) * m


def _run_diffusion_kernel(packed_in, wp, bias, w1, w2):
  n_rows, width = packed_in.shape
  assert width == IN_W
  # Big tiles for HBM roofline, but always >= MIN_GRID_TILES grid steps (v7x megacore).
  row_tile = min(ROW_TILE_MAX, _round_up(pl.cdiv(n_rows, MIN_GRID_TILES), 8))
  n_pad = _round_up(n_rows, row_tile)
  if n_pad != n_rows:
    packed_in = jnp.pad(packed_in, ((0, n_pad - n_rows), (0, 0)))

  grid_spec = pltpu.PrefetchScalarGridSpec(
      num_scalar_prefetch=0,
      grid=(n_pad // row_tile,),
      in_specs=[
          pl.BlockSpec((row_tile, IN_W), lambda i: (i, 0)),    # packed per-frame inputs
          pl.BlockSpec((H, C), lambda i: (0, 0)),              # prior out-proj (resident)
          pl.BlockSpec((8, 2 * H), lambda i: (0, 0)),          # packed biases (resident)
          pl.BlockSpec((4 * C, 2 * H), lambda i: (0, 0)),      # fused layer-1 weights
          pl.BlockSpec((2 * H, 2 * C), lambda i: (0, 0)),      # fused layer-2 weights
      ],
      out_specs=pl.BlockSpec((row_tile, OUT_W), lambda i: (i, 0)),
  )

  out = pl.pallas_call(
      _diffusion_tts_kernel,
      grid_spec=grid_spec,
      out_shape=jax.ShapeDtypeStruct((n_pad, OUT_W), jnp.float32),
      compiler_params=pltpu.CompilerParams(
          dimension_semantics=("parallel",),        # independent row tiles (v7x 2 TCs)
          vmem_limit_bytes=32 * 1024 * 1024),
  )(packed_in, wp, bias, w1, w2)
  return out[:n_rows]


# ------------------------------------------------------------------ glue ------
def init_params(key, vocab):
  ks = jax.random.split(key, 16)
  s = 0.1
  return {
      'tok_emb': jax.random.normal(ks[0], (vocab, H), jnp.float32) * s,
      'w_spk':   jax.random.normal(ks[1], (C, H), jnp.float32) * s,
      'wp':      jax.random.normal(ks[2], (H, C), jnp.float32) * s,
      'bp':      jnp.zeros((C,), jnp.float32),
      'w1a':     jax.random.normal(ks[3], (C, H), jnp.float32) * s,
      'w1b':     jax.random.normal(ks[4], (C, H), jnp.float32) * s,
      'w1c':     jax.random.normal(ks[5], (C, H), jnp.float32) * s,
      'b1':      jnp.zeros((H,), jnp.float32),
      'wt':      jax.random.normal(ks[6], (H,), jnp.float32) * s,
      'w2':      jax.random.normal(ks[7], (H, C), jnp.float32) * s,
      'b2':      jnp.zeros((C,), jnp.float32),
      'w1p':     jax.random.normal(ks[8], (C, H), jnp.float32) * s,
      'b1p':     jnp.zeros((H,), jnp.float32),
      'wtp':     jax.random.normal(ks[9], (H,), jnp.float32) * s,
      'w2p':     jax.random.normal(ks[10], (H, C), jnp.float32) * s,
      'b2p':     jnp.zeros((C,), jnp.float32),
  }


def _pack_weights(p):
  """Fuse estimator weights: one (4C,2H) first layer, one block-diag (2H,2C) second."""
  w1 = jnp.zeros((4 * C, 2 * H), jnp.float32)
  w1 = w1.at[0 * C:1 * C, 0:H].set(p['w1a'])       # xt  -> hid_main
  w1 = w1.at[1 * C:2 * C, 0:H].set(p['w1b'])       # mu  -> hid_main
  w1 = w1.at[2 * C:3 * C, 0:H].set(p['w1c'])       # spk -> hid_main
  w1 = w1.at[3 * C:4 * C, H:2 * H].set(p['w1p'])   # pt  -> hid_prompt
  w2 = jnp.zeros((2 * H, 2 * C), jnp.float32)
  w2 = w2.at[0:H, 0:C].set(p['w2'])
  w2 = w2.at[H:2 * H, C:2 * C].set(p['w2p'])
  bias = jnp.zeros((8, 2 * H), jnp.float32)
  bias = bias.at[0, 0:C].set(p['bp'])
  bias = bias.at[1, :].set(jnp.concatenate([p['b1'], p['b1p']]))
  bias = bias.at[2, :].set(jnp.concatenate([p['wt'], p['wtp']]))
  bias = bias.at[3, :].set(jnp.concatenate([p['b2'], p['b2p']]))
  return {
      'wp': p['wp'].astype(jnp.bfloat16),   # bf16 MXU operands, f32 accumulation in-kernel
      'bias': bias,
      'w1': w1.astype(jnp.bfloat16),
      'w2': w2.astype(jnp.bfloat16),
  }


def diffusion_tts_forward(params, src_tokens, mel2ph, ref_mels, key):
  """Mirrors DiffusionTTS.forward under the chosen hparams config."""
  B, T = mel2ph.shape

  # --- ref-enc-is-None branch: spk mask from nonzero ref frames, spk_embed = ref_mels
  spk_mask = jnp.any(ref_mels != 0, axis=-1, keepdims=True).astype(jnp.float32)  # (B,T,1)
  spk_embed = ref_mels

  # --- stub priority_encoder glue: token embedding + mel2ph gather (FastSpeech style)
  emb = params['tok_emb'][src_tokens]                                    # (B, S, H)
  emb = jnp.concatenate([jnp.zeros((B, 1, H), emb.dtype), emb], axis=1)  # pad index 0
  frame_emb = jnp.take_along_axis(emb, mel2ph[..., None], axis=1)        # (B, T, H)
  spk_pool = (spk_embed * spk_mask).sum(1) / jnp.maximum(spk_mask.sum(1), 1.0)
  h = frame_emb + (spk_pool @ params['w_spk'])[:, None, :]               # (B, T, H)

  # --- diffusion randoms (t, z, z_prompt) ---
  k1, k2, k3 = jax.random.split(key, 3)
  t = jax.random.uniform(k1, (B,), jnp.float32, 1e-3, 1.0 - 1e-3)
  z = jax.random.normal(k2, (B, T, C), jnp.float32)
  zp = jax.random.normal(k3, (B, T, C), jnp.float32)

  # --- pack everything into one lane-dense (B*T, 5*C) operand ---
  BT = B * T
  keep_col = (mel2ph != 0).astype(jnp.float32).reshape(BT, 1)
  t_col = jnp.broadcast_to(t[:, None, None], (B, T, 1)).reshape(BT, 1)
  misc = jnp.concatenate(
      [keep_col, t_col, jnp.zeros((BT, C - 2), jnp.float32)], axis=-1)   # (BT, C)
  packed_in = jnp.concatenate(
      [h.reshape(BT, H), ref_mels.reshape(BT, C),
       z.reshape(BT, C), zp.reshape(BT, C), misc], axis=-1)              # (BT, 160)

  w = _pack_weights(params)
  out = _run_diffusion_kernel(packed_in, w['wp'], w['bias'], w['w1'], w['w2'])

  def seg(slot):
    return out[:, slot * C:(slot + 1) * C].reshape(B, T, C)

  prior_out = {'mel_out': seg(_OUT_MEL)}                 # (B, T, C)
  diff_out = {
      'diff_x0_pred': seg(_OUT_X0P),                     # (B, T, C) == torch .transpose(1,2)
      'diff_noise_pred': seg(_OUT_NP),                   # (B, T, C)
      'diff_noise_gt': seg(_OUT_NGT),                    # (B, T, C)
      'diff_prompt_pred': seg(_OUT_PP),                  # (B, T, C)
      'diff_prompt_gt': spk_embed,                       # (B, T, C)
      'ref_latent_mask': None,                           # stays None in this branch
      'diff_prompt_noise_pred': seg(_OUT_PNP),           # (B, T, C)
      'diff_prompt_noise_gt': zp,                        # verbatim input; not re-stored
  }
  return prior_out, diff_out


# ------------------------------------------------------------------ main ------
if __name__ == "__main__":
  B, T, S, VOCAB = 2, 16, 8, 20

  root = jax.random.PRNGKey(0)
  k_param, k_tok, k_m2p, k_ref, k_fwd = jax.random.split(root, 5)

  params = init_params(k_param, VOCAB)

  src_tokens = jax.random.randint(k_tok, (B, S), 1, VOCAB, jnp.int32)
  mel2ph = jax.random.randint(k_m2p, (B, T), 1, S + 1, jnp.int32)
  mel2ph = mel2ph.at[1, -3:].set(0)                 # some padded mel frames in batch 1

  ref_mels = jax.random.normal(k_ref, (B, T, C), jnp.float32)
  ref_mels = ref_mels.at[1, -4:, :].set(0.0)        # zero (pad) ref frames -> spk_mask=0

  prior_out, diff_out = diffusion_tts_forward(params, src_tokens, mel2ph, ref_mels, k_fwd)
  jax.block_until_ready(diff_out['diff_x0_pred'])

  assert prior_out['mel_out'].shape == (B, T, C)
  for name in ('diff_x0_pred', 'diff_noise_pred', 'diff_noise_gt',
               'diff_prompt_pred', 'diff_prompt_noise_pred', 'diff_prompt_noise_gt'):
    assert diff_out[name].shape == (B, T, C), name
  assert bool(jnp.all(jnp.isfinite(diff_out['diff_x0_pred'])))
  assert bool(jnp.all(jnp.isfinite(diff_out['diff_noise_pred'])))
  # masked frames (mel2ph == 0) must have zero x0 / noise reconstructions
  assert bool(jnp.all(diff_out['diff_x0_pred'][1, -3:] == 0.0))
  assert bool(jnp.all(diff_out['diff_noise_gt'][1, -3:] == 0.0))

  print("KERNEL_OK")
</pallas_src>

<mosaic_0001>
module attributes {stable_mosaic.version = 11 : i64} {
  func.func @_diffusion_tts_kernel(%arg0: i32, %arg1: memref<8x160xf32, #tpu.memory_space<vmem>>, %arg2: memref<32x32xbf16, #tpu.memory_space<vmem>>, %arg3: memref<8x64xf32, #tpu.memory_space<vmem>>, %arg4: memref<128x64xbf16, #tpu.memory_space<vmem>>, %arg5: memref<64x64xbf16, #tpu.memory_space<vmem>>, %arg6: memref<8x192xf32, #tpu.memory_space<vmem>>) attributes {dimension_semantics = [#tpu.dimension_semantics<parallel>], iteration_bounds = array<i64: 4>, scalar_prefetch = 0 : i64, scratch_operands = 0 : i64, tpu.core_type = #tpu.core_type<tc>, window_params = [{transform_indices = @transform_0, window_bounds = array<i64: 8, 160>}, {pipeline_mode = #tpu.pipeline_mode<synchronous>, transform_indices = @transform_1, window_bounds = array<i64: 32, 32>}, {pipeline_mode = #tpu.pipeline_mode<synchronous>, transform_indices = @transform_2, window_bounds = array<i64: 8, 64>}, {pipeline_mode = #tpu.pipeline_mode<synchronous>, transform_indices = @transform_3, window_bounds = array<i64: 128, 64>}, {pipeline_mode = #tpu.pipeline_mode<synchronous>, transform_indices = @transform_4, window_bounds = array<i64: 64, 64>}, {transform_indices = @transform_5, window_bounds = array<i64: 8, 192>}]} {
    %c0 = arith.constant 0 : index
    %c0_0 = arith.constant 0 : index
    %0 = vector.load %arg1[%c0, %c0_0] : memref<8x160xf32, #tpu.memory_space<vmem>>, vector<8x160xf32>
    %1 = vector.extract_strided_slice %0 {offsets = [0, 0], sizes = [8, 32], strides = [1, 1]} : vector<8x160xf32> to vector<8x32xf32>
    %2 = vector.extract_strided_slice %0 {offsets = [0, 32], sizes = [8, 32], strides = [1, 1]} : vector<8x160xf32> to vector<8x32xf32>
    %3 = vector.extract_strided_slice %0 {offsets = [0, 64], sizes = [8, 32], strides = [1, 1]} : vector<8x160xf32> to vector<8x32xf32>
    %4 = vector.extract_strided_slice %0 {offsets = [0, 64], sizes = [8, 64], strides = [1, 1]} : vector<8x160xf32> to vector<8x64xf32>
    %5 = vector.extract_strided_slice %0 {offsets = [0, 128], sizes = [8, 32], strides = [1, 1]} : vector<8x160xf32> to vector<8x32xf32>
    %6 = vector.extract_strided_slice %5 {offsets = [0, 0], sizes = [8, 1], strides = [1, 1]} : vector<8x32xf32> to vector<8x1xf32>
    %7 = vector.extract_strided_slice %5 {offsets = [0, 1], sizes = [8, 1], strides = [1, 1]} : vector<8x32xf32> to vector<8x1xf32>
    %c0_1 = arith.constant 0 : index
    %c0_2 = arith.constant 0 : index
    %8 = vector.load %arg3[%c0_1, %c0_2] : memref<8x64xf32, #tpu.memory_space<vmem>>, vector<8x64xf32>
    %9 = vector.extract_strided_slice %8 {offsets = [0, 0], sizes = [1, 32], strides = [1, 1]} : vector<8x64xf32> to vector<1x32xf32>
    %10 = vector.extract_strided_slice %8 {offsets = [1, 0], sizes = [1, 64], strides = [1, 1]} : vector<8x64xf32> to vector<1x64xf32>
    %11 = vector.extract_strided_slice %8 {offsets = [2, 0], sizes = [1, 64], strides = [1, 1]} : vector<8x64xf32> to vector<1x64xf32>
    %12 = vector.extract_strided_slice %8 {offsets = [3, 0], sizes = [1, 64], strides = [1, 1]} : vector<8x64xf32> to vector<1x64xf32>
    %cst = arith.constant 5.000000e-02 : f32
    %13 = vector.broadcast %cst : f32 to vector<8x1xf32>
    %14 = arith.mulf %7, %13 : vector<8x1xf32>
    %15 = arith.mulf %7, %7 : vector<8x1xf32>
    %cst_3 = arith.constant 9.975000e+00 : f32
    %16 = vector.broadcast %cst_3 : f32 to vector<8x1xf32>
    %17 = arith.mulf %16, %15 : vector<8x1xf32>
    %18 = arith.addf %14, %17 : vector<8x1xf32>
    %cst_4 = arith.constant -5.000000e-01 : f32
    %19 = vector.broadcast %cst_4 : f32 to vector<8x1xf32>
    %20 = arith.mulf %19, %18 : vector<8x1xf32>
    %21 = math.exp %20 : vector<8x1xf32>
    %cst_5 = arith.constant 5.000000e-01 : f32
    %22 = vector.broadcast %cst_5 : f32 to vector<8x1xf32>
    %23 = arith.mulf %22, %18 : vector<8x1xf32>
    %24 = math.exp %23 : vector<8x1xf32>
    %cst_6 = arith.constant 0.000000e+00 : f32
    %25 = vector.broadcast %cst_6 : f32 to vector<8x1xf32>
    %26 = arith.subf %25, %18 : vector<8x1xf32>
    %27 = math.exp %26 : vector<8x1xf32>
    %cst_7 = arith.constant 1.000000e+00 : f32
    %28 = vector.broadcast %cst_7 : f32 to vector<8x1xf32>
    %29 = arith.subf %28, %27 : vector<8x1xf32>
    %30 = math.sqrt %29 : vector<8x1xf32>
    %31 = arith.truncf %1 : vector<8x32xf32> to vector<8x32xbf16>
    %c0_8 = arith.constant 0 : index
    %c0_9 = arith.constant 0 : index
    %32 = vector.load %arg2[%c0_8, %c0_9] : memref<32x32xbf16, #tpu.memory_space<vmem>>, vector<32x32xbf16>
    %cst_10 = arith.constant dense<0.000000e+00> : vector<8x32xf32>
    %33 = tpu.matmul %31, %32, %cst_10 {dimension_numbers = #tpu.dot_dimension_numbers<[1], [0], [0], [1], [0, 0, 1, 1], [], []>} : vector<8x32xbf16>, vector<32x32xbf16>, vector<8x32xf32> -> vector<8x32xf32>
    %34 = vector.broadcast %9 : vector<1x32xf32> to vector<8x32xf32>
    %35 = arith.addf %33, %34 : vector<8x32xf32>
    %36 = vector.broadcast %21 : vector<8x1xf32> to vector<8x32xf32>
    %37 = arith.mulf %2, %36 : vector<8x32xf32>
    %38 = vector.broadcast %30 : vector<8x1xf32> to vector<8x64xf32>
    %39 = arith.mulf %4, %38 : vector<8x64xf32>
    %cst_11 = arith.constant 1.000000e+00 : f32
    %40 = vector.broadcast %cst_11 : f32 to vector<8x1xf32>
    %41 = arith.subf %40, %21 : vector<8x1xf32>
    %42 = vector.broadcast %41 : vector<8x1xf32> to vector<8x32xf32>
    %43 = arith.mulf %35, %42 : vector<8x32xf32>
    %44 = arith.addf %37, %43 : vector<8x32xf32>
    %45 = vector.extract_strided_slice %39 {offsets = [0, 0], sizes = [8, 32], strides = [1, 1]} : vector<8x64xf32> to vector<8x32xf32>
    %46 = arith.addf %44, %45 : vector<8x32xf32>
    %47 = vector.broadcast %6 : vector<8x1xf32> to vector<8x32xf32>
    %48 = arith.mulf %46, %47 : vector<8x32xf32>
    %49 = vector.extract_strided_slice %39 {offsets = [0, 32], sizes = [8, 32], strides = [1, 1]} : vector<8x64xf32> to vector<8x32xf32>
    %50 = arith.addf %37, %49 : vector<8x32xf32>
    %51 = tpu.concatenate %48, %35, %2, %50 in 1 : vector<8x32xf32>, vector<8x32xf32>, vector<8x32xf32>, vector<8x32xf32> -> vector<8x128xf32>
    %52 = arith.truncf %51 : vector<8x128xf32> to vector<8x128xbf16>
    %c0_12 = arith.constant 0 : index
    %c0_13 = arith.constant 0 : index
    %53 = vector.load %arg4[%c0_12, %c0_13] : memref<128x64xbf16, #tpu.memory_space<vmem>>, vector<128x64xbf16>
    %cst_14 = arith.constant dense<0.000000e+00> : vector<8x64xf32>
    %54 = tpu.matmul %52, %53, %cst_14 {dimension_numbers = #tpu.dot_dimension_numbers<[1], [0], [0], [1], [0, 0, 1, 1], [], []>} : vector<8x128xbf16>, vector<128x64xbf16>, vector<8x64xf32> -> vector<8x64xf32>
    %55 = vector.broadcast %10 : vector<1x64xf32> to vector<8x64xf32>
    %56 = arith.addf %54, %55 : vector<8x64xf32>
    %57 = vector.broadcast %11 : vector<1x64xf32> to vector<8x64xf32>
    %58 = vector.broadcast %7 : vector<8x1xf32> to vector<8x64xf32>
    %59 = arith.mulf %57, %58 : vector<8x64xf32>
    %60 = arith.addf %56, %59 : vector<8x64xf32>
    %cst_15 = arith.constant 0.000000e+00 : f32
    %61 = vector.broadcast %cst_15 : f32 to vector<8x64xf32>
    %62 = arith.maximumf %60, %61 : vector<8x64xf32>
    %63 = arith.truncf %62 : vector<8x64xf32> to vector<8x64xbf16>
    %c0_16 = arith.constant 0 : index
    %c0_17 = arith.constant 0 : index
    %64 = vector.load %arg5[%c0_16, %c0_17] : memref<64x64xbf16, #tpu.memory_space<vmem>>, vector<64x64xbf16>
    %cst_18 = arith.constant dense<0.000000e+00> : vector<8x64xf32>
    %65 = tpu.matmul %63, %64, %cst_18 {dimension_numbers = #tpu.dot_dimension_numbers<[1], [0], [0], [1], [0, 0, 1, 1], [], []>} : vector<8x64xbf16>, vector<64x64xbf16>, vector<8x64xf32> -> vector<8x64xf32>
    %66 = vector.broadcast %12 : vector<1x64xf32> to vector<8x64xf32>
    %67 = arith.addf %65, %66 : vector<8x64xf32>
    %68 = vector.extract_strided_slice %67 {offsets = [0, 0], sizes = [8, 32], strides = [1, 1]} : vector<8x64xf32> to vector<8x32xf32>
    %69 = vector.extract_strided_slice %67 {offsets = [0, 32], sizes = [8, 32], strides = [1, 1]} : vector<8x64xf32> to vector<8x32xf32>
    %70 = arith.mulf %30, %24 : vector<8x1xf32>
    %71 = arith.subf %3, %68 : vector<8x32xf32>
    %72 = vector.broadcast %70 : vector<8x1xf32> to vector<8x32xf32>
    %73 = arith.mulf %72, %71 : vector<8x32xf32>
    %74 = arith.addf %2, %73 : vector<8x32xf32>
    %75 = tpu.concatenate %74, %68, %3 in 1 : vector<8x32xf32>, vector<8x32xf32>, vector<8x32xf32> -> vector<8x96xf32>
    %76 = vector.broadcast %6 : vector<8x1xf32> to vector<8x96xf32>
    %77 = arith.mulf %75, %76 : vector<8x96xf32>
    %78 = vector.broadcast %30 : vector<8x1xf32> to vector<8x32xf32>
    %79 = arith.mulf %78, %69 : vector<8x32xf32>
    %80 = arith.subf %50, %79 : vector<8x32xf32>
    %81 = vector.broadcast %24 : vector<8x1xf32> to vector<8x32xf32>
    %82 = arith.mulf %80, %81 : vector<8x32xf32>
    %83 = tpu.concatenate %35, %77, %82, %69 in 1 : vector<8x32xf32>, vector<8x96xf32>, vector<8x32xf32>, vector<8x32xf32> -> vector<8x192xf32>
    %c0_19 = arith.constant 0 : index
    %c0_20 = arith.constant 0 : index
    %84 = vector.load %arg6[%c0_19, %c0_20] : memref<8x192xf32, #tpu.memory_space<vmem>>, vector<8x192xf32>
    tpu.vector_store %arg6[%c0_19, %c0_20], %83 {strides = array<i32>} : memref<8x192xf32, #tpu.memory_space<vmem>>, vector<8x192xf32>,
    return
  }
  func.func @transform_0(%arg0: i32) -> (i32, i32) {
    %c0_i32 = arith.constant 0 : i32
    %c0_i32_0 = arith.constant 0 : i32
    return %arg0, %c0_i32 : i32, i32
  }
  func.func @transform_1(%arg0: i32) -> (i32, i32) {
    %c0_i32 = arith.constant 0 : i32
    %c0_i32_0 = arith.constant 0 : i32
    %c0_i32_1 = arith.constant 0 : i32
    return %c0_i32, %c0_i32_0 : i32, i32
  }
  func.func @transform_2(%arg0: i32) -> (i32, i32) {
    %c0_i32 = arith.constant 0 : i32
    %c0_i32_0 = arith.constant 0 : i32
    %c0_i32_1 = arith.constant 0 : i32
    return %c0_i32, %c0_i32_0 : i32, i32
  }
  func.func @transform_3(%arg0: i32) -> (i32, i32) {
    %c0_i32 = arith.constant 0 : i32
    %c0_i32_0 = arith.constant 0 : i32
    %c0_i32_1 = arith.constant 0 : i32
    return %c0_i32, %c0_i32_0 : i32, i32
  }
  func.func @transform_4(%arg0: i32) -> (i32, i32) {
    %c0_i32 = arith.constant 0 : i32
    %c0_i32_0 = arith.constant 0 : i32
    %c0_i32_1 = arith.constant 0 : i32
    return %c0_i32, %c0_i32_0 : i32, i32
  }
  func.func @transform_5(%arg0: i32) -> (i32, i32) {
    %c0_i32 = arith.constant 0 : i32
    %c0_i32_0 = arith.constant 0 : i32
    return %arg0, %c0_i32 : i32, i32
  }
}

</mosaic_0001>

<llo_original>
// kernel: tpu_custom_call.1
$region0: #{tpu_custom_call.1}
  #allocation0 [shape = 'u32[]', space=smem, size = 0x4, offset = 0x4, fixed_abs, tag = 'smem constant byte address 0x4 - core index']
  #allocation1 [shape = 'u32[144,128]{1,0:T(1,128)}', space=vmem, size = 0x12000, scoped, tag = 'internal scratch']
  %s0 = inlined_call_operand.vmem [shape: f32[32,160], index: 0, kind: input, shape index: {}]
  %s1 = inlined_call_operand.hbm [shape: bf16[32,32], index: 1, kind: input, shape index: {}]
  %s2 = inlined_call_operand.hbm [shape: f32[8,64], index: 2, kind: input, shape index: {}]
  %s3 = inlined_call_operand.vmem [shape: bf16[128,64], index: 3, kind: input, shape index: {}]
  %s4 = inlined_call_operand.vmem [shape: bf16[64,64], index: 4, kind: input, shape index: {}]
  %s5 = inlined_call_operand.hbm [shape: f32[32,192], index: 5, kind: output, shape index: {}]
  %s6 = sld [smem:[#allocation0]]
  $region61: #{tpu_custom_call.1} parent=0
    _
  %s8 = ssub.s32 1, %s6
  %s9 = scalar_select 0, %s8, %s6
  $region1: #{tpu_custom_call.1} parent=0
    #allocation2 [shape = 'u8[8192]{0}', space=vmem, size = 0x2000, scoped, tag = 'input window, operand 1, single buffered']
    #allocation3 [shape = 's32[2]{0}', space=sflag, size = 0x8, scoped, tag = 'scoped memory for tpu_custom_call.1']
    #allocation4 [shape = 's32[2]{0}', space=sflag, size = 0x8, scoped, tag = 'scoped memory for tpu_custom_call.1']
    #allocation5 [shape = 'u8[4096]{0}', space=vmem, size = 0x1000, scoped, tag = 'input window, operand 2, single buffered']
    #allocation6 [shape = 's32[1]{0}', space=sflag, size = 0x4, scoped, tag = 'scoped memory for tpu_custom_call.1']
    #allocation7 [shape = 'u8[16384]{0}', space=vmem, size = 0x4000, scoped, tag = 'output window, operand 0']
    %10 = vsyncpa [#allocation3], 0
    %11 = vsyncpa [#allocation6], 0
    %12 = vsyncpa [#allocation4], 0
    %s13 = scalar_lea.sflag [#allocation4], 1
    %14 = vsyncpa %s13, 0
    loop: start=0, step=1, limit=6
    $region2: #{tpu_custom_call.1} parent=1 // loop_pre_header
      _
    $region3: #{tpu_custom_call.1} parent=1 // loop_header
      %s16 = sphi 0, %s20
      %p17 = scmp.ge.s32.totalorder %s16, 6
      %s26 = sphi 0, %s28
      %s29 = sphi 0, %s26
      %s30 = sphi 0, %s29
      %s46 = sphi 0, %s30
      %s50 = sphi 0, %s50
      %s52 = sphi 0, %s50
      %s53 = sphi 0, %s52
      %s67 = sphi 0, %s53
      %s71 = sphi 0, %s71
      %s73 = sphi 0, %s71
      %s74 = sphi 0, %s73
      %s88 = sphi 0, %s74
      %s92 = sphi 0, %s92
      %s94 = sphi 0, %s92
      %s95 = sphi 0, %s94
      %s109 = sphi 0, %s95
      %s113 = sphi 0, %s113
      %s115 = sphi 0, %s113
      %s116 = sphi 0, %s115
      %s130 = sphi 0, %s116
      %s136 = sphi 0, %s138
      %s139 = sphi 0, %s136
      %s140 = sphi 0, %s139
      %s156 = sphi 0, %s140
    $region4: #{tpu_custom_call.1} parent=1 // loop_header_branch
      %19 = sbr.rel (%p17) target = $region8
    $region5: #{tpu_custom_call.1} parent=1 // loop_body
      %s21 = ssub.s32 %s16, 1
      %s22 = ssub.s32 %s16, 2
      %s23 = sadd.s32 %s16, 1
      %s24 = ssub.s32 %s16, %s23
      %p25 = scmp.eq.s32.totalorder %s24, 0
      %s27 = sadd.s32 %s26, 1
      %s28 = scalar_select %p25, %s26, %s27
      %p31 = pneg %p25
      %p32 = scmp.eq.s32.totalorder %s16, 3
      %p33 = por %p31, %p32
      %p34 = scmp.ne.s32.totalorder %s26, %s29
      %p35 = scmp.eq.s32.totalorder %s16, 0
      %p36 = por %p34, %p35
      %p37 = scmp.ne.s32.totalorder %s26, %s29
      %p38 = scmp.eq.s32.totalorder %s21, 3
      %p39 = por %p37, %p38
      %p40 = scmp.ne.s32.totalorder %s29, %s30
      %p41 = scmp.eq.s32.totalorder %s21, 0
      %p42 = por %p40, %p41
      %p43 = scmp.ne.s32.totalorder %s29, %s30
      %p44 = scmp.eq.s32.totalorder %s22, 3
      %p45 = por %p43, %p44
      %p47 = scmp.ne.s32.totalorder %s30, %s46
      %p48 = scmp.eq.s32.totalorder %s22, 0
      %p49 = por %p47, %p48
      %s51 = sadd.s32 %s50, 1
      %p54 = scmp.eq.s32.totalorder %s16, 3
      %p55 = scmp.ne.s32.totalorder %s50, %s52
      %p56 = scmp.eq.s32.totalorder %s16, 0
      %p57 = por %p55, %p56
      %p58 = scmp.ne.s32.totalorder %s50, %s52
      %p59 = scmp.eq.s32.totalorder %s21, 3
      %p60 = por %p58, %p59
      %p61 = scmp.ne.s32.totalorder %s52, %s53
      %p62 = scmp.eq.s32.totalorder %s21, 0
      %p63 = por %p61, %p62
      %p64 = scmp.ne.s32.totalorder %s52, %s53
      %p65 = scmp.eq.s32.totalorder %s22, 3
      %p66 = por %p64, %p65
      %p68 = scmp.ne.s32.totalorder %s53, %s67
      %p69 = scmp.eq.s32.totalorder %s22, 0
      %p70 = por %p68, %p69
      %s72 = sadd.s32 %s71, 1
      %p75 = scmp.eq.s32.totalorder %s16, 3
      %p76 = scmp.ne.s32.totalorder %s71, %s73
      %p77 = scmp.eq.s32.totalorder %s16, 0
      %p78 = por %p76, %p77
      %p79 = scmp.ne.s32.totalorder %s71, %s73
      %p80 = scmp.eq.s32.totalorder %s21, 3
      %p81 = por %p79, %p80
      %p82 = scmp.ne.s32.totalorder %s73, %s74
      %p83 = scmp.eq.s32.totalorder %s21, 0
      %p84 = por %p82, %p83
      %p85 = scmp.ne.s32.totalorder %s73, %s74
      %p86 = scmp.eq.s32.totalorder %s22, 3
      %p87 = por %p85, %p86
      %p89 = scmp.ne.s32.totalorder %s74, %s88
      %p90 = scmp.eq.s32.totalorder %s22, 0
      %p91 = por %p89, %p90
      %s93 = sadd.s32 %s92, 1
      %p96 = scmp.eq.s32.totalorder %s16, 3
      %p97 = scmp.ne.s32.totalorder %s92, %s94
      %p98 = scmp.eq.s32.totalorder %s16, 0
      %p99 = por %p97, %p98
      %p100 = scmp.ne.s32.totalorder %s92, %s94
      %p101 = scmp.eq.s32.totalorder %s21, 3
      %p102 = por %p100, %p101
      %p103 = scmp.ne.s32.totalorder %s94, %s95
      %p104 = scmp.eq.s32.totalorder %s21, 0
      %p105 = por %p103, %p104
      %p106 = scmp.ne.s32.totalorder %s94, %s95
      %p107 = scmp.eq.s32.totalorder %s22, 3
      %p108 = por %p106, %p107
      %p110 = scmp.ne.s32.totalorder %s95, %s109
      %p111 = scmp.eq.s32.totalorder %s22, 0
      %p112 = por %p110, %p111
      %s114 = sadd.s32 %s113, 1
      %p117 = scmp.eq.s32.totalorder %s16, 3
      %p118 = scmp.ne.s32.totalorder %s113, %s115
      %p119 = scmp.eq.s32.totalorder %s16, 0
      %p120 = por %p118, %p119
      %p121 = scmp.ne.s32.totalorder %s113, %s115
      %p122 = scmp.eq.s32.totalorder %s21, 3
      %p123 = por %p121, %p122
      %p124 = scmp.ne.s32.totalorder %s115, %s116
      %p125 = scmp.eq.s32.totalorder %s21, 0
      %p126 = por %p124, %p125
      %p127 = scmp.ne.s32.totalorder %s115, %s116
      %p128 = scmp.eq.s32.totalorder %s22, 3
      %p129 = por %p127, %p128
      %p131 = scmp.ne.s32.totalorder %s116, %s130
      %p132 = scmp.eq.s32.totalorder %s22, 0
      %p133 = por %p131, %p132
      %s134 = ssub.s32 %s16, %s23
      %p135 = scmp.eq.s32.totalorder %s134, 0
      %s137 = sadd.s32 %s136, 1
      %s138 = scalar_select %p135, %s136, %s137
      %p141 = pneg %p135
      %p142 = scmp.eq.s32.totalorder %s16, 3
      %p143 = por %p141, %p142
      %p144 = scmp.ne.s32.totalorder %s136, %s139
      %p145 = scmp.eq.s32.totalorder %s16, 0
      %p146 = por %p144, %p145
      %p147 = scmp.ne.s32.totalorder %s136, %s139
      %p148 = scmp.eq.s32.totalorder %s21, 3
      %p149 = por %p147, %p148
      %p150 = scmp.ne.s32.totalorder %s139, %s140
      %p151 = scmp.eq.s32.totalorder %s21, 0
      %p152 = por %p150, %p151
      %p153 = scmp.ne.s32.totalorder %s139, %s140
      %p154 = scmp.eq.s32.totalorder %s22, 3
      %p155 = por %p153, %p154
      %p157 = scmp.ne.s32.totalorder %s140, %s156
      %p158 = scmp.eq.s32.totalorder %s22, 0
      %p159 = por %p157, %p158
      %p160 = scmp.le.s32.totalorder 1, %s16
      %p161 = scmp.lt.s32.totalorder %s16, 5
      %p162 = pnand %p160, %p161
      %p163 = pneg %p162
      // Predicated region
      $region9: #{tpu_custom_call.1} parent=5 // pred_check
        _
      $region10: #{tpu_custom_call.1} parent=5 // pred_check_branch
        %165 = sbr.rel (%p162) target = $region12
      $region11: #{tpu_custom_call.1} parent=5 // pred_region
        %s166 = ssub.s32 %s16, 1
        // Predicated region
        $region13: #{tpu_custom_call.1} parent=11 // pred_check
          %p167 = pneg %p63
        $region14: #{tpu_custom_call.1} parent=11 // pred_check_branch
          %169 = sbr.rel (%p167) target = $region16
        $region15: #{tpu_custom_call.1} parent=11 // pred_region
          %s171 = ssub.s32 256, 256
          %172 = vsyncadd [#allocation3], %s171
          %s173 = sshll.u32 [#allocation2], 4
          %s174 = int_to_ptr.vmem [resolvable:$true] %s173
          %179 = dma.hbm_to_vmem [thread:$0]  %s1, 256, %s174, [#allocation3], 64, 64, 4
        $region16: #{tpu_custom_call.1} parent=11 // pred_fallthru
          _
        // Predicated region
        $region17: #{tpu_custom_call.1} parent=11 // pred_check
          %p180 = pneg %p84
        $region18: #{tpu_custom_call.1} parent=11 // pred_check_branch
          %182 = sbr.rel (%p180) target = $region20
        $region19: #{tpu_custom_call.1} parent=11 // pred_region
          %s184 = ssub.s32 128, 128
          %185 = vsyncadd [#allocation6], %s184
          %s187 = sshll.u32 [#allocation5], 4
          %s188 = int_to_ptr.vmem [resolvable:$true] %s187
          %190 = dma.hbm_to_vmem [thread:$0]  %s2, 128, %s188, [#allocation6]
        $region20: #{tpu_custom_call.1} parent=11 // pred_fallthru
          _
        // Predicated region
        $region21: #{tpu_custom_call.1} parent=11 // pred_check
          %p191 = pneg %p105
        $region22: #{tpu_custom_call.1} parent=11 // pred_check_branch
          %193 = sbr.rel (%p191) target = $region24
        $region23: #{tpu_custom_call.1} parent=11 // pred_region
          _
        $region24: #{tpu_custom_call.1} parent=11 // pred_fallthru
          _
        // Predicated region
        $region25: #{tpu_custom_call.1} parent=11 // pred_check
          %p194 = pneg %p126
        $region26: #{tpu_custom_call.1} parent=11 // pred_check_branch
          %196 = sbr.rel (%p194) target = $region28
        $region27: #{tpu_custom_call.1} parent=11 // pred_region
          _
        $region28: #{tpu_custom_call.1} parent=11 // pred_fallthru
          _
      $region12: #{tpu_custom_call.1} parent=5 // pred_fallthru
        _
      %p197 = scmp.lt.s32.totalorder %s16, 4
      // Predicated region
      $region29: #{tpu_custom_call.1} parent=5 // pred_check
        %p198 = pneg %p197
      $region30: #{tpu_custom_call.1} parent=5 // pred_check_branch
        %200 = sbr.rel (%p198) target = $region32
      $region31: #{tpu_custom_call.1} parent=5 // pred_region
        // Predicated region
        $region33: #{tpu_custom_call.1} parent=31 // pred_check
          %p201 = pneg %p36
        $region34: #{tpu_custom_call.1} parent=31 // pred_check_branch
          %203 = sbr.rel (%p201) target = $region36
        $region35: #{tpu_custom_call.1} parent=31 // pred_region
          %p204 = scmp.lt.s32.totalorder %s16, 3
          %s205 = scalar_select %p204, %s16, 3
          %s206 = smul.addr %s205, 2
          %s207 = smul.addr %s206, 8
          %s208 = scalar_lea.vmem %s0, %s207
        $region36: #{tpu_custom_call.1} parent=31 // pred_fallthru
          _
      $region32: #{tpu_custom_call.1} parent=5 // pred_fallthru
        _
      %p209 = scmp.le.s32.totalorder 1, %s16
      %p210 = scmp.lt.s32.totalorder %s16, 5
      %p211 = pnand %p209, %p210
      %p212 = pneg %p211
      // Predicated region
      $region37: #{tpu_custom_call.1} parent=5 // pred_check
        _
      $region38: #{tpu_custom_call.1} parent=5 // pred_check_branch
        %214 = sbr.rel (%p211) target = $region40
      $region39: #{tpu_custom_call.1} parent=5 // pred_region
        %s215 = ssub.s32 %s16, 1
        // Predicated region
        $region41: #{tpu_custom_call.1} parent=39 // pred_check
          %p216 = pneg %p63
        $region42: #{tpu_custom_call.1} parent=39 // pred_check_branch
          %218 = sbr.rel (%p216) target = $region44
        $region43: #{tpu_custom_call.1} parent=39 // pred_region
          %219 = dma.done [#allocation3], 256
        $region44: #{tpu_custom_call.1} parent=39 // pred_fallthru
          _
        // Predicated region
        $region45: #{tpu_custom_call.1} parent=39 // pred_check
          %p220 = pneg %p84
        $region46: #{tpu_custom_call.1} parent=39 // pred_check_branch
          %222 = sbr.rel (%p220) target = $region48
        $region47: #{tpu_custom_call.1} parent=39 // pred_region
          %223 = dma.done [#allocation6], 128
        $region48: #{tpu_custom_call.1} parent=39 // pred_fallthru
          _
        %p224 = scmp.lt.s32.totalorder %s21, 3
        %s225 = scalar_select %p224, %s21, 3
        %s226 = smul.addr %s225, 2
        %s227 = smul.addr %s226, 8
        %s228 = scalar_lea.vmem %s0, %s227
        %p229 = pneg %p42
        %p230 = pneg %p39
        %p231 = pneg %p63
        %p232 = pneg %p60
        %p233 = pneg %p84
        %p234 = pneg %p81
        %p235 = pneg %p105
        %p236 = pneg %p102
        %p237 = pneg %p126
        %p238 = pneg %p123
        %p239 = pneg %p152
        %p240 = pneg %p149
        %s241 = sand.u32 %s139, 1
        %s242 = scalar_lea.sflag [#allocation4], %s241
        %s243 = sand.u32 %s139, 1
        %s244 = smul.addr %s243, 16
        %s245 = scalar_lea.vmem [#allocation7], %s244
        %p246 = scmp.lt.s32.totalorder %s21, 3
        %s247 = scalar_select %p246, %s21, 3
        %s248 = smul.addr %s247, 2
        %s249 = smul.addr %s248, 8
        %s250 = scalar_lea.vmem %s0, %s249
        %v252 = vld [vmem:[%s250] sm:$0xff]
        %v253 = vld [vmem:[%s250 + $0x8] sm:$0xff]
        %v254 = vld [vmem:[#allocation5] sm:$0xff]
        %v255 = vmul.f32 %v253, 0.05
        %v256 = vmul.f32 %v253, %v253
        %v257 = vmul.f32 %v256, 9.975
        %v258 = vadd.f32 %v255, %v257
        %v259 = vmul.f32 %v258, -0.5
        %v260 = vmul.f32 %v259, 1.442695
        %v261 = vpow.pop %v260
        %v262 = vmul.f32 %v258, 0.5
        %v263 = vmul.f32 %v262, 1.442695
        %v264 = vpow.pop %v263
        %v265 = vsub.f32 0.0, %v258
        %v266 = vmul.f32 %v265, 1.442695
        %v267 = vpow.pop %v266
        %v268 = vsub.f32 1.0, %v267
        %v269 = vrsqrt.pop %v268
        %v270 = vmul.f32 %v268, %v269
        %vm271 = vcmp.eq.f32.partialorder %v268, inf
        %v272 = vsel %vm271, %v268, %v270
        %vm273 = vcmp.eq.f32.partialorder %v268, 0.0
        %v274 = vand.u32 %v268, 2147483648
        %v275 = vsel %vm273, %v274, %v272
        %v276 = vpack.c.bf16 %v252, %v252
        %v277 = vld [vmem:[#allocation2] sm:$0xf]
        %v278 = vld [vmem:[#allocation2 + $0x4] sm:$0xf]
        %v279 = vld [vmem:[#allocation2 + $0x8] sm:$0xf]
        %v280 = vld [vmem:[#allocation2 + $0xc] sm:$0xf]
        %v281 = vlaneseq
        %v282 = vshrl.u32 %v281, 7
        %v283 = vsub.s32 0, %v282
        %v284 = vrot.slane %v254, %v283
        %v289 = vunpack.c.l.b16 %v277
        %v290 = vunpack.c.l.b16 %v278
        %v291 = vunpack.c.l.b16 %v279
        %v292 = vunpack.c.l.b16 %v280
        %v293 = vpack.c.b16 %v290, %v289
        %v294 = vpack.c.b16 %v292, %v291
        %vm297 = vcmask 261120
        %v299 = vsel %vm297, %v276, 0
        %301 = vmatprep.subr.bf16.mxu0 0
        %302 = vmatpush1.bf16.msra.mxu0 %v293
        %303 = vmatprep.subr.bf16.mxu0 0
        %304 = vmatpush1.bf16.msra.mxu0 %v294
        %305 = vmatprep.subr.bf16.mxu0 0
        %306 = vmatpush1.bf16.msra.mxu0 0
        %307 = vmatprep.subr.bf16.mxu0 0
        %308 = vmatpush1.bf16.msra.mxu0 0
        %309 = vmatprep.subr.bf16.mxu0 0
        %310 = vmatpush1.bf16.msra.mxu0 0
        %311 = vmatprep.subr.bf16.mxu0 0
        %312 = vmatpush1.bf16.msra.mxu0 0
        %313 = vmatprep.subr.bf16.mxu0 0
        %314 = vmatpush1.bf16.msra.mxu0 0
        %315 = vmatprep.subr.bf16.mxu0 0
        %316 = vmatpush1.bf16.msra.mxu0 0
        %317 = vmatprep.subr.bf16.mxu0 0
        %318 = vmatpush1.bf16.msra.mxu0 0
        %319 = vmatprep.subr.bf16.mxu0 0
        %320 = vmatpush1.bf16.msra.mxu0 0
        %321 = vmatprep.subr.bf16.mxu0 0
        %322 = vmatpush1.bf16.msra.mxu0 0
        %323 = vmatprep.subr.bf16.mxu0 0
        %324 = vmatpush1.bf16.msra.mxu0 0
        %325 = vmatprep.subr.bf16.mxu0 0
        %326 = vmatpush1.bf16.msra.mxu0 0
        %327 = vmatprep.subr.bf16.mxu0 0
        %328 = vmatpush1.bf16.msra.mxu0 0
        %329 = vmatprep.subr.bf16.mxu0 0
        %330 = vmatpush1.bf16.msra.mxu0 0
        %331 = vmatprep.subr.bf16.mxu0 0
        %332 = vmatpush1.bf16.msra.mxu0 0
        %333 = vmatprep.mubr.bf16.mxu0 0
        %334 = vmatmul.mubr.bf16.gmra.mrb[0].mxu0 %v299
        %v335 = vpop.f32.mrb[0].mxu0
        %v336 = vadd.f32 %v284, %v335
        %v337 = vpop.f32.mrb[0].mxu0
        %v338 = vpop.f32.mrb[0].mxu0
        %v339 = vpop.f32.mrb[0].mxu0
        %340 = vdwg.mxu0
        %342 = vset.pattern.permute.xlu0 1
        %343 = vperm.xlu0 %342, %v261
        %v344 = vpop.permute.xlu0 %343
        %v346 = vmul.f32 %v252, %v344
        %348 = vset.pattern.permute.xlu0 1
        %349 = vperm.xlu0 %348, %v275
        %v350 = vpop.permute.xlu0 %349
        %v352 = vmul.f32 %v252, %v350
        %v353 = vsub.f32 1.0, %v261
        %355 = vset.pattern.permute.xlu0 1
        %356 = vperm.xlu0 %355, %v353
        %v357 = vpop.permute.xlu0 %356
        %v359 = vmul.f32 %v336, %v357
        %361 = vrot.lane.b32.xlu0 %v359, 32
        %v362 = vpop.permute.xlu0 %361
        %v364 = vadd.f32 %v346, %v362
        %366 = vrot.lane.b32.xlu0 %v352, 96
        %v367 = vpop.permute.xlu0 %366
        %v369 = vadd.f32 %v364, %v367
        %371 = vset.pattern.permute.xlu0 0
        %372 = vperm.xlu0 %371, %v253
        %v373 = vpop.permute.xlu0 %372
        %v375 = vmul.f32 %v369, %v373
        %376 = vrot.lane.b32.xlu0 %v352, 64
        %v377 = vpop.permute.xlu0 %376
        %v379 = vadd.f32 %v346, %v377
        %381 = vrot.lane.b32.xlu0 %v375, 96
        %v382 = vpop.permute.xlu0 %381
        %385 = vrot.lane.b32.xlu0 %v336, 32
        %v386 = vpop.permute.xlu0 %385
        %389 = vrot.lane.b32.xlu0 %v252, 32
        %v390 = vpop.permute.xlu0 %389
        %393 = vrot.lane.b32.xlu0 %v379, 64
        %v394 = vpop.permute.xlu0 %393
        %v396 = vsel %vm297, %v382, %v386
        %vm397 = vcmask 523264
        %v398 = vsel %vm397, %v396, %v390
        %vm399 = vcmask 785408
        %v400 = vsel %vm399, %v398, %v394
        %v401 = vpack.c.bf16 %v400, %v400
        %v402 = vld [vmem:[%s3] sm:$0xf]
        %v403 = vld [vmem:[%s3 + $0x4] sm:$0xf]
        %v404 = vld [vmem:[%s3 + $0x8] sm:$0xf]
        %v405 = vld [vmem:[%s3 + $0xc] sm:$0xf]
        %v406 = vld [vmem:[%s3 + $0x10] sm:$0xf]
        %v407 = vld [vmem:[%s3 + $0x14] sm:$0xf]
        %v408 = vld [vmem:[%s3 + $0x18] sm:$0xf]
        %v409 = vld [vmem:[%s3 + $0x1c] sm:$0xf]
        %v410 = vld [vmem:[%s3 + $0x20] sm:$0xf]
        %v411 = vld [vmem:[%s3 + $0x24] sm:$0xf]
        %v412 = vld [vmem:[%s3 + $0x28] sm:$0xf]
        %v413 = vld [vmem:[%s3 + $0x2c] sm:$0xf]
        %v414 = vld [vmem:[%s3 + $0x30] sm:$0xf]
        %v415 = vld [vmem:[%s3 + $0x34] sm:$0xf]
        %v416 = vld [vmem:[%s3 + $0x38] sm:$0xf]
        %v417 = vld [vmem:[%s3 + $0x3c] sm:$0xf]
        %v418 = vlaneseq
        %v419 = vshrl.u32 %v418, 7
        %v420 = vsub.s32 1, %v419
        %v421 = vrot.slane %v254, %v420
        %v438 = vunpack.c.l.b16 %v402
        %v439 = vunpack.c.l.b16 %v403
        %v440 = vunpack.c.l.b16 %v404
        %v441 = vunpack.c.l.b16 %v405
        %v442 = vunpack.c.l.b16 %v406
        %v443 = vunpack.c.l.b16 %v407
        %v444 = vunpack.c.l.b16 %v408
        %v445 = vunpack.c.l.b16 %v409
        %v446 = vunpack.c.l.b16 %v410
        %v447 = vunpack.c.l.b16 %v411
        %v448 = vunpack.c.l.b16 %v412
        %v449 = vunpack.c.l.b16 %v413
        %v450 = vunpack.c.l.b16 %v414
        %v451 = vunpack.c.l.b16 %v415
        %v452 = vunpack.c.l.b16 %v416
        %v453 = vunpack.c.l.b16 %v417
        %v454 = vpack.c.b16 %v439, %v438
        %v455 = vpack.c.b16 %v441, %v440
        %v456 = vpack.c.b16 %v443, %v442
        %v457 = vpack.c.b16 %v445, %v444
        %v458 = vpack.c.b16 %v447, %v446
        %v459 = vpack.c.b16 %v449, %v448
        %v460 = vpack.c.b16 %v451, %v450
        %v461 = vpack.c.b16 %v453, %v452
        %470 = vmatprep.subr.bf16.mxu0 0
        %471 = vmatpush1.bf16.msra.mxu0 %v454
        %472 = vmatprep.subr.bf16.mxu0 0
        %473 = vmatpush1.bf16.msra.mxu0 %v455
        %474 = vmatprep.subr.bf16.mxu0 0
        %475 = vmatpush1.bf16.msra.mxu0 %v456
        %476 = vmatprep.subr.bf16.mxu0 0
        %477 = vmatpush1.bf16.msra.mxu0 %v457
        %478 = vmatprep.subr.bf16.mxu0 0
        %479 = vmatpush1.bf16.msra.mxu0 %v458
        %480 = vmatprep.subr.bf16.mxu0 0
        %481 = vmatpush1.bf16.msra.mxu0 %v459
        %482 = vmatprep.subr.bf16.mxu0 0
        %483 = vmatpush1.bf16.msra.mxu0 %v460
        %484 = vmatprep.subr.bf16.mxu0 0
        %485 = vmatpush1.bf16.msra.mxu0 %v461
        %486 = vmatprep.subr.bf16.mxu0 0
        %487 = vmatpush1.bf16.msra.mxu0 0
        %488 = vmatprep.subr.bf16.mxu0 0
        %489 = vmatpush1.bf16.msra.mxu0 0
        %490 = vmatprep.subr.bf16.mxu0 0
        %491 = vmatpush1.bf16.msra.mxu0 0
        %492 = vmatprep.subr.bf16.mxu0 0
        %493 = vmatpush1.bf16.msra.mxu0 0
        %494 = vmatprep.subr.bf16.mxu0 0
        %495 = vmatpush1.bf16.msra.mxu0 0
        %496 = vmatprep.subr.bf16.mxu0 0
        %497 = vmatpush1.bf16.msra.mxu0 0
        %498 = vmatprep.subr.bf16.mxu0 0
        %499 = vmatpush1.bf16.msra.mxu0 0
        %500 = vmatprep.subr.bf16.mxu0 0
        %501 = vmatpush1.bf16.msra.mxu0 0
        %502 = vmatprep.mubr.bf16.mxu0 0
        %503 = vmatmul.mubr.bf16.gmra.mrb[0].mxu0 %v401
        %v504 = vpop.f32.mrb[0].mxu0
        %v505 = vadd.f32 %v421, %v504
        %v506 = vpop.f32.mrb[0].mxu0
        %v507 = vpop.f32.mrb[0].mxu0
        %v508 = vpop.f32.mrb[0].mxu0
        %509 = vdwg.mxu0
        %v510 = vlaneseq
        %v511 = vshrl.u32 %v510, 7
        %v512 = vsub.s32 2, %v511
        %v513 = vrot.slane %v254, %v512
        %514 = vset.pattern.permute.xlu0 1
        %515 = vperm.xlu0 %514, %v253
        %v516 = vpop.permute.xlu0 %515
        %v518 = vmul.f32 %v513, %v516
        %v519 = vadd.f32 %v505, %v518
        %v520 = vmax.f32 %v519, 0.0
        %v521 = vpack.c.bf16 %v520, %v520
        %v522 = vld [vmem:[%s4] sm:$0xf]
        %v523 = vld [vmem:[%s4 + $0x4] sm:$0xf]
        %v524 = vld [vmem:[%s4 + $0x8] sm:$0xf]
        %v525 = vld [vmem:[%s4 + $0xc] sm:$0xf]
        %v526 = vld [vmem:[%s4 + $0x10] sm:$0xf]
        %v527 = vld [vmem:[%s4 + $0x14] sm:$0xf]
        %v528 = vld [vmem:[%s4 + $0x18] sm:$0xf]
        %v529 = vld [vmem:[%s4 + $0x1c] sm:$0xf]
        %v530 = vlaneseq
        %v531 = vshrl.u32 %v530, 7
        %v532 = vsub.s32 3, %v531
        %v533 = vrot.slane %v254, %v532
        %v542 = vunpack.c.l.b16 %v522
        %v543 = vunpack.c.l.b16 %v523
        %v544 = vunpack.c.l.b16 %v524
        %v545 = vunpack.c.l.b16 %v525
        %v546 = vunpack.c.l.b16 %v526
        %v547 = vunpack.c.l.b16 %v527
        %v548 = vunpack.c.l.b16 %v528
        %v549 = vunpack.c.l.b16 %v529
        %v550 = vpack.c.b16 %v543, %v542
        %v551 = vpack.c.b16 %v545, %v544
        %v552 = vpack.c.b16 %v547, %v546
        %v553 = vpack.c.b16 %v549, %v548
        %v559 = vsel %vm397, %v521, 0
        %561 = vmatprep.subr.bf16.mxu0 0
        %562 = vmatpush1.bf16.msra.mxu0 %v550
        %563 = vmatprep.subr.bf16.mxu0 0
        %564 = vmatpush1.bf16.msra.mxu0 %v551
        %565 = vmatprep.subr.bf16.mxu0 0
        %566 = vmatpush1.bf16.msra.mxu0 %v552
        %567 = vmatprep.subr.bf16.mxu0 0
        %568 = vmatpush1.bf16.msra.mxu0 %v553
        %569 = vmatprep.subr.bf16.mxu0 0
        %570 = vmatpush1.bf16.msra.mxu0 0
        %571 = vmatprep.subr.bf16.mxu0 0
        %572 = vmatpush1.bf16.msra.mxu0 0
        %573 = vmatprep.subr.bf16.mxu0 0
        %574 = vmatpush1.bf16.msra.mxu0 0
        %575 = vmatprep.subr.bf16.mxu0 0
        %576 = vmatpush1.bf16.msra.mxu0 0
        %577 = vmatprep.subr.bf16.mxu0 0
        %578 = vmatpush1.bf16.msra.mxu0 0
        %579 = vmatprep.subr.bf16.mxu0 0
        %580 = vmatpush1.bf16.msra.mxu0 0
        %581 = vmatprep.subr.bf16.mxu0 0
        %582 = vmatpush1.bf16.msra.mxu0 0
        %583 = vmatprep.subr.bf16.mxu0 0
        %584 = vmatpush1.bf16.msra.mxu0 0
        %585 = vmatprep.subr.bf16.mxu0 0
        %586 = vmatpush1.bf16.msra.mxu0 0
        %587 = vmatprep.subr.bf16.mxu0 0
        %588 = vmatpush1.bf16.msra.mxu0 0
        %589 = vmatprep.subr.bf16.mxu0 0
        %590 = vmatpush1.bf16.msra.mxu0 0
        %591 = vmatprep.subr.bf16.mxu0 0
        %592 = vmatpush1.bf16.msra.mxu0 0
        %593 = vmatprep.mubr.bf16.mxu0 0
        %594 = vmatmul.mubr.bf16.gmra.mrb[0].mxu0 %v559
        %v595 = vpop.f32.mrb[0].mxu0
        %v596 = vadd.f32 %v533, %v595
        %v597 = vpop.f32.mrb[0].mxu0
        %v598 = vpop.f32.mrb[0].mxu0
        %v599 = vpop.f32.mrb[0].mxu0
        %600 = vdwg.mxu0
        %v601 = vmul.f32 %v275, %v264
        %603 = vrot.lane.b32.xlu0 %v596, 64
        %v604 = vpop.permute.xlu0 %603
        %v606 = vsub.f32 %v252, %v604
        %608 = vset.pattern.permute.xlu0 1
        %609 = vperm.xlu0 %608, %v601
        %v610 = vpop.permute.xlu0 %609
        %v612 = vmul.f32 %v610, %v606
        %614 = vrot.lane.b32.xlu0 %v612, 96
        %v615 = vpop.permute.xlu0 %614
        %v617 = vadd.f32 %v252, %v615
        %619 = vrot.lane.b32.xlu0 %v617, 96
        %v620 = vpop.permute.xlu0 %619
        %622 = vrot.lane.b32.xlu0 %v596, 32
        %v623 = vpop.permute.xlu0 %622
        %v625 = vsel %vm297, %v620, %v623
        %v626 = vsel %vm397, %v625, %v252
        %v627 = vmul.f32 %v626, %v373
        %v628 = vmul.f32 %v350, %v596
        %v629 = vsub.f32 %v379, %v628
        %631 = vset.pattern.permute.xlu0 1
        %632 = vperm.xlu0 %631, %v264
        %v633 = vpop.permute.xlu0 %632
        %v635 = vmul.f32 %v629, %v633
        %637 = vrot.lane.b32.xlu0 %v627, 32
        %v638 = vpop.permute.xlu0 %637
        %641 = vrot.lane.b32.xlu0 %v635, 96
        %v642 = vpop.permute.xlu0 %641
        %v644 = vsel %vm297, %v336, %v638
        %v645 = vsel %vm297, %v642, %v596
        %646 = vst [vmem:[%s245] sm:$0xff] %v644
        %647 = vst.msk [vmem:[%s245 + $0x8] sm:$0xff] %vm397, %v645
        %s648 = sand.u32 %s139, 1
        %s649 = scalar_lea.sflag [#allocation4], %s648
        %s650 = sand.u32 %s139, 1
        %s651 = smul.addr %s650, 16
        %s652 = scalar_lea.vmem [#allocation7], %s651
        // Predicated region
        $region49: #{tpu_custom_call.1} parent=39 // pred_check
          %p653 = pneg %p149
        $region50: #{tpu_custom_call.1} parent=39 // pred_check_branch
          %655 = sbr.rel (%p653) target = $region52
        $region51: #{tpu_custom_call.1} parent=39 // pred_region
          %s657 = ssub.s32 256, 256
          %658 = vsyncadd %s649, %s657
          %s659 = smul.addr %s21, 2
          %s660 = smul.addr %s659, 128
          %s661 = scalar_lea.hbm %s5, %s660
          %s663 = sshll.u32 %s652, 4
          %s664 = int_to_ptr.vmem [resolvable:$true] %s663
          %666 = dma.vmem_to_hbm [thread:$0]  %s664, 256, %s661, %s649
        $region52: #{tpu_custom_call.1} parent=39 // pred_fallthru
          _
      $region40: #{tpu_custom_call.1} parent=5 // pred_fallthru
        _
      %p667 = scmp.le.s32.totalorder 2, %s16
      // Predicated region
      $region53: #{tpu_custom_call.1} parent=5 // pred_check
        %p668 = pneg %p667
      $region54: #{tpu_custom_call.1} parent=5 // pred_check_branch
        %670 = sbr.rel (%p668) target = $region56
      $region55: #{tpu_custom_call.1} parent=5 // pred_region
        %s671 = ssub.s32 %s16, 2
        // Predicated region
        $region57: #{tpu_custom_call.1} parent=55 // pred_check
          %p672 = pneg %p155
        $region58: #{tpu_custom_call.1} parent=55 // pred_check_branch
          %674 = sbr.rel (%p672) target = $region60
        $region59: #{tpu_custom_call.1} parent=55 // pred_region
          %s675 = sand.u32 %s140, 1
          %s676 = scalar_lea.sflag [#allocation4], %s675
          %s677 = sand.u32 %s140, 1
          %s678 = smul.addr %s677, 16
          %s679 = scalar_lea.vmem [#allocation7], %s678
          %680 = dma.done %s676, 256
        $region60: #{tpu_custom_call.1} parent=55 // pred_fallthru
          _
      $region56: #{tpu_custom_call.1} parent=5 // pred_fallthru
        _
    $region6: #{tpu_custom_call.1} parent=1 // loop_footer
      %s20 = sadd.s32 1, %s16
    $region7: #{tpu_custom_call.1} parent=1 // loop_footer_branch
      %15 = sbr.rel target = $region3
    $region8: #{tpu_custom_call.1} parent=1 // loop_exit
      _
    %681 = vsyncpa [#allocation3], 1
    %s682 = scalar_lea.sflag [#allocation3], 1
    %683 = vsyncpa %s682, 1
    %684 = vsyncpa [#allocation6], 1
    %685 = vsyncpa [#allocation4], 1
    %s686 = scalar_lea.sflag [#allocation4], 1
    %687 = vsyncpa %s686, 1

</llo_original>
